<compile_context>
chip_gen: v5e
topology: v5e:2x2
jax: 0.10.0
libtpu: 0.0.40
codegen_flags: <defaults>
</compile_context>

<pallas_src>
import functools

import jax
import jax.numpy as jnp
from jax import lax
from jax.experimental import pallas as pl
from jax.experimental.pallas import tpu as pltpu


def _attention_kernel(x_ref, w_ref, o_ref, *, b, cq, ckv, heads, dim_head, scale):
    """Single invocation; the whole (tiny) problem is resident in VMEM.

    x_ref : (b*cq + b*ckv, D)        rows 0:b*cq are x_q, the rest are x_kv
    w_ref : (D+1, 3*D + dim)         [:D, :3D] = [Wq|Wk|Wv], [:D, 3D:] = Wo,
                                     [D, 3D:]  = to_out bias
    o_ref : (b*cq, dim)
    """
    D = heads * dim_head
    nq = b * cq

    x = x_ref[...]                               # (nq + nkv, D)
    w = w_ref[...]                               # (D+1, 3D+dim)

    w_qkv = w[:D, :3 * D]                        # (D, 3D)
    w_out = w[:D, 3 * D:]                        # (D, dim)
    b_out = w[D:D + 1, 3 * D:]                   # (1, dim)

    # One fused, lane-dense QKV projection over all rows (x_q and x_kv alike);
    # the unused cross terms cost nothing extra at this size.
    proj = jnp.dot(x, w_qkv, preferred_element_type=jnp.float32)   # (rows, 3D)

    q = proj[:nq, :D] * scale                    # (b*cq,  D)   scale folded into q
    k = proj[nq:, D:2 * D]                       # (b*ckv, D)
    v = proj[nq:, 2 * D:]                        # (b*ckv, D)

    dn_scores = (((2,), (2,)), ((0,), (0,)))     # contract d, batch over b
    dn_av = (((2,), (1,)), ((0,), (0,)))         # contract ckv, batch over b

    head_outs = []
    for hh in range(heads):                      # static, tiny (heads == 2)
        sl = slice(hh * dim_head, (hh + 1) * dim_head)
        q_h = q[:, sl].reshape(b, cq, dim_head)      # (b, cq,  d)
        k_h = k[:, sl].reshape(b, ckv, dim_head)     # (b, ckv, d)
        v_h = v[:, sl].reshape(b, ckv, dim_head)     # (b, ckv, d)

        s = lax.dot_general(q_h, k_h, dn_scores,
                            preferred_element_type=jnp.float32)     # (b, cq, ckv)
        s = s - jnp.max(s, axis=-1, keepdims=True)
        p = jnp.exp(s)
        attn = p / jnp.sum(p, axis=-1, keepdims=True)                # exact softmax
        head_outs.append(
            lax.dot_general(attn, v_h, dn_av,
                            preferred_element_type=jnp.float32))     # (b, cq, d)

    # concat heads on the lane axis, then one output-projection matmul (+ bias)
    out_cat = jnp.concatenate(head_outs, axis=-1).reshape(nq, D)     # (b*cq, D)
    o = jnp.dot(out_cat, w_out, preferred_element_type=jnp.float32) + b_out
    o_ref[...] = o.astype(o_ref.dtype)            # single store of all rows


def attention_pallas(x_q, x_kv, params, *, heads, dim_head):
    b, cq, D = x_q.shape
    b2, ckv, D2 = x_kv.shape
    assert b2 == b and D2 == D and D == heads * dim_head
    wq, wkv, wo, bo = params["wq"], params["wkv"], params["wo"], params["bo"]
    dim = wo.shape[1]
    scale = dim_head ** -0.5

    # --- trace-time layout prep (plain XLA, outside the kernel) -----------------
    # one activation slab: x_q rows stacked on x_kv rows
    x_all = jnp.concatenate(
        [x_q.reshape(b * cq, D), x_kv.reshape(b * ckv, D)], axis=0)

    # one weight slab: [Wq | Wk | Wv | Wo] columns, bias as an extra bottom row
    w_top = jnp.concatenate([wq, wkv, wo], axis=1)                    # (D, 3D+dim)
    bias_row = jnp.concatenate(
        [jnp.zeros((1, 3 * D), wo.dtype), bo.reshape(1, dim)], axis=1)
    w_slab = jnp.concatenate([w_top, bias_row], axis=0)               # (D+1, 3D+dim)

    kernel = functools.partial(_attention_kernel, b=b, cq=cq, ckv=ckv,
                               heads=heads, dim_head=dim_head, scale=scale)

    vmem = pl.BlockSpec(memory_space=pltpu.MemorySpace.VMEM)
    out = pl.pallas_call(
        kernel,
        out_shape=jax.ShapeDtypeStruct((b * cq, dim), x_q.dtype),
        in_specs=[vmem, vmem],
        out_specs=pl.BlockSpec(memory_space=pltpu.MemorySpace.VMEM),
    )(x_all, w_slab)
    return out.reshape(b, cq, dim)


def attention_ref(x_q, x_kv, params, *, heads, dim_head):
    """Pure-JAX reference mirroring the PyTorch forward."""
    D = heads * dim_head
    q = x_q @ params["wq"]
    kv = x_kv @ params["wkv"]
    k, v = kv[..., :D], kv[..., D:]

    def split_heads(t):
        b, c, _ = t.shape
        return t.reshape(b, c, heads, dim_head).transpose(0, 2, 1, 3)

    q, k, v = split_heads(q), split_heads(k), split_heads(v)
    dots = jnp.einsum("bhid,bhjd->bhij", q, k) * (dim_head ** -0.5)
    attn = jax.nn.softmax(dots, axis=-1)
    out = jnp.einsum("bhij,bhjd->bhid", attn, v)
    b, h, c, d = out.shape
    out = out.transpose(0, 2, 1, 3).reshape(b, c, h * d)
    return out @ params["wo"] + params["bo"]


if __name__ == "__main__":
    # Small shapes consistent with the module: dim=32, heads=2, dim_head=16.
    heads, dim_head = 2, 16
    D = heads * dim_head          # inner_dim == heads * dim_head == 32
    dim = 32                      # to_out projects inner_dim -> dim
    b, cq, ckv = 2, 8, 8

    key = jax.random.PRNGKey(0)
    k_wq, k_wkv, k_wo, k_bo, k_xq, k_xkv = jax.random.split(key, 6)

    # Deterministic init mimicking PyTorch Linear default U(-1/sqrt(fan_in), +).
    bound = 1.0 / (D ** 0.5)
    params = {
        "wq": jax.random.uniform(k_wq, (D, D), jnp.float32, -bound, bound),
        "wkv": jax.random.uniform(k_wkv, (D, 2 * D), jnp.float32, -bound, bound),
        "wo": jax.random.uniform(k_wo, (D, dim), jnp.float32, -bound, bound),
        "bo": jax.random.uniform(k_bo, (1, dim), jnp.float32, -bound, bound),
    }

    x_q = jax.random.normal(k_xq, (b, cq, D), jnp.float32)
    x_kv = jax.random.normal(k_xkv, (b, ckv, D), jnp.float32)

    out = attention_pallas(x_q, x_kv, params, heads=heads, dim_head=dim_head)
    out = jax.block_until_ready(out)

    ref = attention_ref(x_q, x_kv, params, heads=heads, dim_head=dim_head)
    assert out.shape == (b, cq, dim)
    assert jnp.allclose(out, ref, atol=1e-3, rtol=1e-3), "mismatch vs reference"

    print("KERNEL_OK")
</pallas_src>

<mosaic_0001>
module attributes {stable_mosaic.version = 11 : i64} {
  func.func @_attention_kernel(%arg0: memref<32x32xf32, #tpu.memory_space<vmem>>, %arg1: memref<33x128xf32, #tpu.memory_space<vmem>>, %arg2: memref<16x32xf32, #tpu.memory_space<vmem>>) attributes {dimension_semantics = [], scalar_prefetch = 0 : i64, scratch_operands = 0 : i64, tpu.core_type = #tpu.core_type<tc>} {
    %c0 = arith.constant 0 : index
    %c0_0 = arith.constant 0 : index
    %0 = vector.load %arg0[%c0, %c0_0] : memref<32x32xf32, #tpu.memory_space<vmem>>, vector<32x32xf32>
    %c0_1 = arith.constant 0 : index
    %c0_2 = arith.constant 0 : index
    %1 = vector.load %arg1[%c0_1, %c0_2] : memref<33x128xf32, #tpu.memory_space<vmem>>, vector<33x128xf32>
    %2 = vector.extract_strided_slice %1 {offsets = [0, 0], sizes = [32, 96], strides = [1, 1]} : vector<33x128xf32> to vector<32x96xf32>
    %3 = vector.extract_strided_slice %1 {offsets = [0, 96], sizes = [32, 32], strides = [1, 1]} : vector<33x128xf32> to vector<32x32xf32>
    %4 = vector.extract_strided_slice %1 {offsets = [32, 96], sizes = [1, 32], strides = [1, 1]} : vector<33x128xf32> to vector<1x32xf32>
    %cst = arith.constant dense<0.000000e+00> : vector<32x96xf32>
    %5 = tpu.matmul %0, %2, %cst {dimension_numbers = #tpu.dot_dimension_numbers<[1], [0], [0], [1], [0, 0, 1, 1], [], []>} : vector<32x32xf32>, vector<32x96xf32>, vector<32x96xf32> -> vector<32x96xf32>
    %6 = vector.extract_strided_slice %5 {offsets = [0, 0], sizes = [16, 32], strides = [1, 1]} : vector<32x96xf32> to vector<16x32xf32>
    %cst_3 = arith.constant 2.500000e-01 : f32
    %7 = vector.broadcast %cst_3 : f32 to vector<16x32xf32>
    %8 = arith.mulf %6, %7 : vector<16x32xf32>
    %9 = vector.extract_strided_slice %5 {offsets = [16, 32], sizes = [16, 32], strides = [1, 1]} : vector<32x96xf32> to vector<16x32xf32>
    %10 = vector.extract_strided_slice %5 {offsets = [16, 64], sizes = [16, 32], strides = [1, 1]} : vector<32x96xf32> to vector<16x32xf32>
    %11 = vector.extract_strided_slice %8 {offsets = [0, 0], sizes = [16, 16], strides = [1, 1]} : vector<16x32xf32> to vector<16x16xf32>
    %12 = vector.shape_cast %11 : vector<16x16xf32> to vector<2x8x16xf32>
    %13 = vector.extract_strided_slice %9 {offsets = [0, 0], sizes = [16, 16], strides = [1, 1]} : vector<16x32xf32> to vector<16x16xf32>
    %14 = vector.shape_cast %13 : vector<16x16xf32> to vector<2x8x16xf32>
    %15 = vector.extract_strided_slice %10 {offsets = [0, 0], sizes = [16, 16], strides = [1, 1]} : vector<16x32xf32> to vector<16x16xf32>
    %16 = vector.shape_cast %15 : vector<16x16xf32> to vector<2x8x16xf32>
    %cst_4 = arith.constant dense<0.000000e+00> : vector<2x8x8xf32>
    %17 = tpu.matmul %12, %14, %cst_4 {dimension_numbers = #tpu.dot_dimension_numbers<[2], [2], [1], [1], [0, 0, 0, 1, 1, 1], [0], [0]>} : vector<2x8x16xf32>, vector<2x8x16xf32>, vector<2x8x8xf32> -> vector<2x8x8xf32>
    %cst_5 = arith.constant dense<0xFF800000> : vector<2x8xf32>
    %18 = vector.multi_reduction <maximumf>, %17, %cst_5 [2] : vector<2x8x8xf32> to vector<2x8xf32>
    %19 = vector.shape_cast %18 : vector<2x8xf32> to vector<2x8x1xf32>
    %20 = vector.broadcast %19 : vector<2x8x1xf32> to vector<2x8x8xf32>
    %21 = arith.subf %17, %20 : vector<2x8x8xf32>
    %22 = math.exp %21 : vector<2x8x8xf32>
    %cst_6 = arith.constant dense<0.000000e+00> : vector<2x8xf32>
    %23 = vector.multi_reduction <add>, %22, %cst_6 [2] : vector<2x8x8xf32> to vector<2x8xf32>
    %24 = vector.shape_cast %23 : vector<2x8xf32> to vector<2x8x1xf32>
    %25 = vector.broadcast %24 : vector<2x8x1xf32> to vector<2x8x8xf32>
    %26 = arith.divf %22, %25 : vector<2x8x8xf32>
    %cst_7 = arith.constant dense<0.000000e+00> : vector<2x8x16xf32>
    %27 = tpu.matmul %26, %16, %cst_7 {dimension_numbers = #tpu.dot_dimension_numbers<[2], [1], [1], [2], [0, 0, 0, 1, 1, 2], [0], [0]>} : vector<2x8x8xf32>, vector<2x8x16xf32>, vector<2x8x16xf32> -> vector<2x8x16xf32>
    %28 = vector.extract_strided_slice %8 {offsets = [0, 16], sizes = [16, 16], strides = [1, 1]} : vector<16x32xf32> to vector<16x16xf32>
    %29 = vector.shape_cast %28 : vector<16x16xf32> to vector<2x8x16xf32>
    %30 = vector.extract_strided_slice %9 {offsets = [0, 16], sizes = [16, 16], strides = [1, 1]} : vector<16x32xf32> to vector<16x16xf32>
    %31 = vector.shape_cast %30 : vector<16x16xf32> to vector<2x8x16xf32>
    %32 = vector.extract_strided_slice %10 {offsets = [0, 16], sizes = [16, 16], strides = [1, 1]} : vector<16x32xf32> to vector<16x16xf32>
    %33 = vector.shape_cast %32 : vector<16x16xf32> to vector<2x8x16xf32>
    %cst_8 = arith.constant dense<0.000000e+00> : vector<2x8x8xf32>
    %34 = tpu.matmul %29, %31, %cst_8 {dimension_numbers = #tpu.dot_dimension_numbers<[2], [2], [1], [1], [0, 0, 0, 1, 1, 1], [0], [0]>} : vector<2x8x16xf32>, vector<2x8x16xf32>, vector<2x8x8xf32> -> vector<2x8x8xf32>
    %cst_9 = arith.constant dense<0xFF800000> : vector<2x8xf32>
    %35 = vector.multi_reduction <maximumf>, %34, %cst_9 [2] : vector<2x8x8xf32> to vector<2x8xf32>
    %36 = vector.shape_cast %35 : vector<2x8xf32> to vector<2x8x1xf32>
    %37 = vector.broadcast %36 : vector<2x8x1xf32> to vector<2x8x8xf32>
    %38 = arith.subf %34, %37 : vector<2x8x8xf32>
    %39 = math.exp %38 : vector<2x8x8xf32>
    %cst_10 = arith.constant dense<0.000000e+00> : vector<2x8xf32>
    %40 = vector.multi_reduction <add>, %39, %cst_10 [2] : vector<2x8x8xf32> to vector<2x8xf32>
    %41 = vector.shape_cast %40 : vector<2x8xf32> to vector<2x8x1xf32>
    %42 = vector.broadcast %41 : vector<2x8x1xf32> to vector<2x8x8xf32>
    %43 = arith.divf %39, %42 : vector<2x8x8xf32>
    %cst_11 = arith.constant dense<0.000000e+00> : vector<2x8x16xf32>
    %44 = tpu.matmul %43, %33, %cst_11 {dimension_numbers = #tpu.dot_dimension_numbers<[2], [1], [1], [2], [0, 0, 0, 1, 1, 2], [0], [0]>} : vector<2x8x8xf32>, vector<2x8x16xf32>, vector<2x8x16xf32> -> vector<2x8x16xf32>
    %45 = tpu.concatenate %27, %44 in 2 : vector<2x8x16xf32>, vector<2x8x16xf32> -> vector<2x8x32xf32>
    %46 = vector.shape_cast %45 : vector<2x8x32xf32> to vector<16x32xf32>
    %cst_12 = arith.constant dense<0.000000e+00> : vector<16x32xf32>
    %47 = tpu.matmul %46, %3, %cst_12 {dimension_numbers = #tpu.dot_dimension_numbers<[1], [0], [0], [1], [0, 0, 1, 1], [], []>} : vector<16x32xf32>, vector<32x32xf32>, vector<16x32xf32> -> vector<16x32xf32>
    %48 = vector.broadcast %4 : vector<1x32xf32> to vector<16x32xf32>
    %49 = arith.addf %47, %48 : vector<16x32xf32>
    %c0_13 = arith.constant 0 : index
    %c0_14 = arith.constant 0 : index
    %50 = vector.load %arg2[%c0_13, %c0_14] : memref<16x32xf32, #tpu.memory_space<vmem>>, vector<16x32xf32>
    tpu.vector_store %arg2[%c0_13, %c0_14], %49 {strides = array<i32>} : memref<16x32xf32, #tpu.memory_space<vmem>>, vector<16x32xf32>,
    return
  }
}

</mosaic_0001>

<llo_original>
// kernel: tpu_custom_call.1
$region0: #{tpu_custom_call.1}
  #allocation0 [shape = 'u32[]', space=smem, size = 0x4, offset = 0x4, fixed_abs, tag = 'smem constant byte address 0x4 - core index']
  #allocation1 [shape = 'u32[72,128]{1,0:T(1,128)}', space=vmem, size = 0x9000, scoped, tag = 'internal scratch']
  %s0 = inlined_call_operand.hbm [shape: f32[32,32], index: 0, kind: input, shape index: {}]
  %s1 = inlined_call_operand.hbm [shape: f32[33,128], index: 1, kind: input, shape index: {}]
  %s2 = inlined_call_operand.hbm [shape: f32[16,32], index: 2, kind: output, shape index: {}]
  %s3 = sld [smem:[#allocation0]]
  $region26: #{tpu_custom_call.1} parent=0
    _
  %s5 = ssub.s32 1, %s3
  %s6 = scalar_select 0, %s5, %s3
  $region1: #{tpu_custom_call.1} parent=0
    #allocation2 [shape = 'u8[16384]{0}', space=vmem, size = 0x4000, scoped, tag = 'input window, operand 0, single buffered']
    #allocation3 [shape = 's32[1]{0}', space=sflag, size = 0x4, scoped, tag = 'scoped memory for tpu_custom_call.1']
    #allocation4 [shape = 's32[1]{0}', space=sflag, size = 0x4, scoped, tag = 'scoped memory for tpu_custom_call.1']
    #allocation5 [shape = 'u8[20480]{0}', space=vmem, size = 0x5000, scoped, tag = 'input window, operand 1, single buffered']
    #allocation6 [shape = 's32[1]{0}', space=sflag, size = 0x4, scoped, tag = 'scoped memory for tpu_custom_call.1']
    #allocation7 [shape = 'u8[8192]{0}', space=vmem, size = 0x2000, scoped, tag = 'output window, operand 0, single buffered']
    %7 = vsyncpa [#allocation3], 0
    %8 = vsyncpa [#allocation6], 0
    %9 = vsyncpa [#allocation4], 0
    // Predicated region
    $region2: #{tpu_custom_call.1} parent=1 // pred_check
      _
    $region3: #{tpu_custom_call.1} parent=1 // pred_check_branch
      %11 = sbr.rel (0) target = $region5
    $region4: #{tpu_custom_call.1} parent=1 // pred_region
      %13 = vsyncadd [#allocation3], 0
      %s14 = sshll.u32 %s0, 4
      %s15 = int_to_ptr.hbm [resolvable:$true] %s14
      %s16 = sshll.u32 [#allocation2], 4
      %s17 = int_to_ptr.vmem [resolvable:$true] %s16
      %22 = dma.hbm_to_vmem [thread:$0]  %s15, 512, %s17, [#allocation3], 128, 128, 8
    $region5: #{tpu_custom_call.1} parent=1 // pred_fallthru
      _
    // Predicated region
    $region6: #{tpu_custom_call.1} parent=1 // pred_check
      _
    $region7: #{tpu_custom_call.1} parent=1 // pred_check_branch
      %24 = sbr.rel (0) target = $region9
    $region8: #{tpu_custom_call.1} parent=1 // pred_region
      %26 = vsyncadd [#allocation6], 0
      %s27 = sshll.u32 %s1, 4
      %s28 = int_to_ptr.hbm [resolvable:$true] %s27
      %s29 = sshll.u32 [#allocation5], 4
      %s30 = int_to_ptr.vmem [resolvable:$true] %s29
      %35 = dma.hbm_to_vmem [thread:$0]  %s28, 640, %s30, [#allocation6], 128, 128, 8
    $region9: #{tpu_custom_call.1} parent=1 // pred_fallthru
      _
    // Predicated region
    $region10: #{tpu_custom_call.1} parent=1 // pred_check
      _
    $region11: #{tpu_custom_call.1} parent=1 // pred_check_branch
      %37 = sbr.rel (0) target = $region13
    $region12: #{tpu_custom_call.1} parent=1 // pred_region
      %39 = dma.done [#allocation3], 512
    $region13: #{tpu_custom_call.1} parent=1 // pred_fallthru
      _
    // Predicated region
    $region14: #{tpu_custom_call.1} parent=1 // pred_check
      _
    $region15: #{tpu_custom_call.1} parent=1 // pred_check_branch
      %41 = sbr.rel (0) target = $region17
    $region16: #{tpu_custom_call.1} parent=1 // pred_region
      %43 = dma.done [#allocation6], 640
    $region17: #{tpu_custom_call.1} parent=1 // pred_fallthru
      _
    %v44 = vld [vmem:[#allocation2] sm:$0xff]
    %v45 = vld [vmem:[#allocation2 + $0x8] sm:$0xff]
    %v46 = vld [vmem:[#allocation2 + $0x10] sm:$0xff]
    %v47 = vld [vmem:[#allocation2 + $0x18] sm:$0xff]
    %v48 = vld [vmem:[#allocation5] sm:$0xff]
    %v49 = vld [vmem:[#allocation5 + $0x8] sm:$0xff]
    %v50 = vld [vmem:[#allocation5 + $0x10] sm:$0xff]
    %v51 = vld [vmem:[#allocation5 + $0x18] sm:$0xff]
    %v52 = vld [vmem:[#allocation5 + $0x20] sm:$0x1]
    %vm53 = vcmask 261120
    %v55 = vsel %vm53, %v44, 0
    %v58 = vsel %vm53, %v45, 0
    %v61 = vsel %vm53, %v46, 0
    %v64 = vsel %vm53, %v47, 0
    %66 = vmatpush.msra.mxu0 0.0
    %67 = vmatpush.msra.mxu0 0.0
    %68 = vmatpush.msra.mxu0 0.0
    %69 = vmatpush.msra.mxu0 0.0
    %70 = vmatpush.msra.mxu0 0.0
    %71 = vmatpush.msra.mxu0 0.0
    %72 = vmatpush.msra.mxu0 0.0
    %73 = vmatpush.msra.mxu0 0.0
    %74 = vmatpush.msra.mxu0 0.0
    %75 = vmatpush.msra.mxu0 0.0
    %76 = vmatpush.msra.mxu0 0.0
    %77 = vmatpush.msra.mxu0 0.0
    %78 = vmatpush.msra.mxu0 %v51
    %79 = vmatpush.msra.mxu0 %v50
    %80 = vmatpush.msra.mxu0 %v49
    %81 = vmatpush.msra.mxu0 %v48
    %82 = vmatmul.f32.gmra.mxu0 %v55
    %v83 = vpop.f32.mrf.mxu0
    %v84 = vadd.f32 0.0, %v83
    %85 = vmatmul.f32.gmra.mxu0 %v58
    %v86 = vpop.f32.mrf.mxu0
    %v87 = vadd.f32 0.0, %v86
    %88 = vmatmul.f32.gmra.mxu0 %v61
    %v89 = vpop.f32.mrf.mxu0
    %v90 = vadd.f32 0.0, %v89
    %91 = vmatmul.f32.gmra.mxu0 %v64
    %v92 = vpop.f32.mrf.mxu0
    %v93 = vadd.f32 0.0, %v92
    %94 = vdwg.mxu0
    %v95 = vmul.f32 %v84, 0.25
    %v96 = vmul.f32 %v87, 0.25
    %98 = vrot.lane.b32.xlu0 %v90, 96
    %v99 = vpop.permute.xlu0 %98
    %vm100 = vcmask 130048
    %v102 = vsel %vm100, %v95, 0
    %v104 = vsel %vm100, %v99, 0
    %106 = vmatpush.xpose.msra.mxu0 0.0
    %107 = vmatpush.xpose.msra.mxu0 0.0
    %108 = vmatpush.xpose.msra.mxu0 0.0
    %109 = vmatpush.xpose.msra.mxu0 0.0
    %110 = vmatpush.xpose.msra.mxu0 0.0
    %111 = vmatpush.xpose.msra.mxu0 0.0
    %112 = vmatpush.xpose.msra.mxu0 0.0
    %113 = vmatpush.xpose.msra.mxu0 0.0
    %114 = vmatpush.xpose.msra.mxu0 0.0
    %115 = vmatpush.xpose.msra.mxu0 0.0
    %116 = vmatpush.xpose.msra.mxu0 0.0
    %117 = vmatpush.xpose.msra.mxu0 0.0
    %118 = vmatpush.xpose.msra.mxu0 0.0
    %119 = vmatpush.xpose.msra.mxu0 0.0
    %120 = vmatpush.xpose.msra.mxu0 0.0
    %121 = vmatpush.xpose.msra.mxu0 %v104
    %122 = vmatmul.f32.gmra.mxu0 %v102
    %v123 = vpop.f32.mrf.mxu0
    %v124 = vadd.f32 0.0, %v123
    %125 = vdwg.mxu0
    %127 = vrot.lane.b32.xlu0 %v93, 96
    %v128 = vpop.permute.xlu0 %127
    %v130 = vsel %vm100, %v96, 0
    %v132 = vsel %vm100, %v128, 0
    %134 = vmatpush.xpose.msra.mxu0 0.0
    %135 = vmatpush.xpose.msra.mxu0 0.0
    %136 = vmatpush.xpose.msra.mxu0 0.0
    %137 = vmatpush.xpose.msra.mxu0 0.0
    %138 = vmatpush.xpose.msra.mxu0 0.0
    %139 = vmatpush.xpose.msra.mxu0 0.0
    %140 = vmatpush.xpose.msra.mxu0 0.0
    %141 = vmatpush.xpose.msra.mxu0 0.0
    %142 = vmatpush.xpose.msra.mxu0 0.0
    %143 = vmatpush.xpose.msra.mxu0 0.0
    %144 = vmatpush.xpose.msra.mxu0 0.0
    %145 = vmatpush.xpose.msra.mxu0 0.0
    %146 = vmatpush.xpose.msra.mxu0 0.0
    %147 = vmatpush.xpose.msra.mxu0 0.0
    %148 = vmatpush.xpose.msra.mxu0 0.0
    %149 = vmatpush.xpose.msra.mxu0 %v132
    %150 = vmatmul.f32.gmra.mxu0 %v130
    %v151 = vpop.f32.mrf.mxu0
    %v152 = vadd.f32 0.0, %v151
    %153 = vdwg.mxu0
    %vm154 = vcmask 64512
    %v155 = vsel %vm154, %v124, -inf
    %156 = vmax.xlane.f32.xlu0 %v155
    %v157 = vpop.xlane.xlu0 %156
    %v158 = vsel %vm154, %v152, -inf
    %159 = vmax.xlane.f32.xlu0 %v158
    %v160 = vpop.xlane.xlu0 %159
    %v161 = vsub.f32 %v124, %v157
    %v162 = vsub.f32 %v152, %v160
    %v163 = vmul.f32 %v161, 1.442695
    %v164 = vpow.pop %v163
    %v165 = vmul.f32 %v162, 1.442695
    %v166 = vpow.pop %v165
    %v167 = vsel %vm154, %v164, 0.0
    %168 = vadd.xlane.f32.xlu0 %v167
    %v169 = vpop.xlane.xlu0 %168
    %v170 = vsel %vm154, %v166, 0.0
    %171 = vadd.xlane.f32.xlu0 %v170
    %v172 = vpop.xlane.xlu0 %171
    %v173 = vrcp.pop %v169
    %v174 = vmul.f32 %v169, %v173
    %v175 = vsub.f32 1.0, %v174
    %v176 = vmul.f32 %v173, %v175
    %v177 = vadd.f32 %v173, %v176
    %vm178 = vweird.f32 %v169
    %vm179 = vweird.f32 %v173
    %vm180 = vmor %vm178, %vm179
    %v181 = vsel %vm180, %v173, %v177
    %v182 = vand.u32 2147483647, %v169
    %vm183 = vcmp.eq.f32.partialorder %v182, 8.507059e+37
    %v184 = vand.u32 %v169, 2147483648
    %v185 = vor.u32 1.1754944e-38, %v184
    %v186 = vsel %vm183, %v185, %v181
    %v187 = vmul.f32 %v164, %v186
    %v188 = vrcp.pop %v172
    %v189 = vmul.f32 %v172, %v188
    %v190 = vsub.f32 1.0, %v189
    %v191 = vmul.f32 %v188, %v190
    %v192 = vadd.f32 %v188, %v191
    %vm193 = vweird.f32 %v172
    %vm194 = vweird.f32 %v188
    %vm195 = vmor %vm193, %vm194
    %v196 = vsel %vm195, %v188, %v192
    %v197 = vand.u32 2147483647, %v172
    %vm198 = vcmp.eq.f32.partialorder %v197, 8.507059e+37
    %v199 = vand.u32 %v172, 2147483648
    %v200 = vor.u32 1.1754944e-38, %v199
    %v201 = vsel %vm198, %v200, %v196
    %v202 = vmul.f32 %v166, %v201
    %203 = vrot.lane.b32.xlu0 %v90, 64
    %v204 = vpop.permute.xlu0 %203
    %v207 = vsel %vm154, %v187, 0
    %209 = vmatpush.msra.mxu0 0.0
    %210 = vmatpush.msra.mxu0 0.0
    %211 = vmatpush.msra.mxu0 0.0
    %212 = vmatpush.msra.mxu0 0.0
    %213 = vmatpush.msra.mxu0 0.0
    %214 = vmatpush.msra.mxu0 0.0
    %215 = vmatpush.msra.mxu0 0.0
    %216 = vmatpush.msra.mxu0 0.0
    %217 = vmatpush.msra.mxu0 0.0
    %218 = vmatpush.msra.mxu0 0.0
    %219 = vmatpush.msra.mxu0 0.0
    %220 = vmatpush.msra.mxu0 0.0
    %221 = vmatpush.msra.mxu0 0.0
    %222 = vmatpush.msra.mxu0 0.0
    %223 = vmatpush.msra.mxu0 0.0
    %224 = vmatpush.msra.mxu0 %v204
    %225 = vmatmul.f32.gmra.mxu0 %v207
    %v226 = vpop.f32.mrf.mxu0
    %v227 = vadd.f32 0.0, %v226
    %228 = vdwg.mxu0
    %229 = vrot.lane.b32.xlu0 %v93, 64
    %v230 = vpop.permute.xlu0 %229
    %v233 = vsel %vm154, %v202, 0
    %235 = vmatpush.msra.mxu0 0.0
    %236 = vmatpush.msra.mxu0 0.0
    %237 = vmatpush.msra.mxu0 0.0
    %238 = vmatpush.msra.mxu0 0.0
    %239 = vmatpush.msra.mxu0 0.0
    %240 = vmatpush.msra.mxu0 0.0
    %241 = vmatpush.msra.mxu0 0.0
    %242 = vmatpush.msra.mxu0 0.0
    %243 = vmatpush.msra.mxu0 0.0
    %244 = vmatpush.msra.mxu0 0.0
    %245 = vmatpush.msra.mxu0 0.0
    %246 = vmatpush.msra.mxu0 0.0
    %247 = vmatpush.msra.mxu0 0.0
    %248 = vmatpush.msra.mxu0 0.0
    %249 = vmatpush.msra.mxu0 0.0
    %250 = vmatpush.msra.mxu0 %v230
    %251 = vmatmul.f32.gmra.mxu0 %v233
    %v252 = vpop.f32.mrf.mxu0
    %v253 = vadd.f32 0.0, %v252
    %254 = vdwg.mxu0
    %255 = vrot.lane.b32.xlu0 %v95, 112
    %v256 = vpop.permute.xlu0 %255
    %257 = vrot.lane.b32.xlu0 %v90, 80
    %v258 = vpop.permute.xlu0 %257
    %v259 = vsel %vm100, %v256, 0
    %v261 = vsel %vm100, %v258, 0
    %263 = vmatpush.xpose.msra.mxu0 0.0
    %264 = vmatpush.xpose.msra.mxu0 0.0
    %265 = vmatpush.xpose.msra.mxu0 0.0
    %266 = vmatpush.xpose.msra.mxu0 0.0
    %267 = vmatpush.xpose.msra.mxu0 0.0
    %268 = vmatpush.xpose.msra.mxu0 0.0
    %269 = vmatpush.xpose.msra.mxu0 0.0
    %270 = vmatpush.xpose.msra.mxu0 0.0
    %271 = vmatpush.xpose.msra.mxu0 0.0
    %272 = vmatpush.xpose.msra.mxu0 0.0
    %273 = vmatpush.xpose.msra.mxu0 0.0
    %274 = vmatpush.xpose.msra.mxu0 0.0
    %275 = vmatpush.xpose.msra.mxu0 0.0
    %276 = vmatpush.xpose.msra.mxu0 0.0
    %277 = vmatpush.xpose.msra.mxu0 0.0
    %278 = vmatpush.xpose.msra.mxu0 %v261
    %279 = vmatmul.f32.gmra.mxu0 %v259
    %v280 = vpop.f32.mrf.mxu0
    %v281 = vadd.f32 0.0, %v280
    %282 = vdwg.mxu0
    %283 = vrot.lane.b32.xlu0 %v96, 112
    %v284 = vpop.permute.xlu0 %283
    %285 = vrot.lane.b32.xlu0 %v93, 80
    %v286 = vpop.permute.xlu0 %285
    %v287 = vsel %vm100, %v284, 0
    %v289 = vsel %vm100, %v286, 0
    %291 = vmatpush.xpose.msra.mxu0 0.0
    %292 = vmatpush.xpose.msra.mxu0 0.0
    %293 = vmatpush.xpose.msra.mxu0 0.0
    %294 = vmatpush.xpose.msra.mxu0 0.0
    %295 = vmatpush.xpose.msra.mxu0 0.0
    %296 = vmatpush.xpose.msra.mxu0 0.0
    %297 = vmatpush.xpose.msra.mxu0 0.0
    %298 = vmatpush.xpose.msra.mxu0 0.0
    %299 = vmatpush.xpose.msra.mxu0 0.0
    %300 = vmatpush.xpose.msra.mxu0 0.0
    %301 = vmatpush.xpose.msra.mxu0 0.0
    %302 = vmatpush.xpose.msra.mxu0 0.0
    %303 = vmatpush.xpose.msra.mxu0 0.0
    %304 = vmatpush.xpose.msra.mxu0 0.0
    %305 = vmatpush.xpose.msra.mxu0 0.0
    %306 = vmatpush.xpose.msra.mxu0 %v289
    %307 = vmatmul.f32.gmra.mxu0 %v287
    %v308 = vpop.f32.mrf.mxu0
    %v309 = vadd.f32 0.0, %v308
    %310 = vdwg.mxu0
    %v311 = vsel %vm154, %v281, -inf
    %312 = vmax.xlane.f32.xlu0 %v311
    %v313 = vpop.xlane.xlu0 %312
    %v314 = vsel %vm154, %v309, -inf
    %315 = vmax.xlane.f32.xlu0 %v314
    %v316 = vpop.xlane.xlu0 %315
    %v317 = vsub.f32 %v281, %v313
    %v318 = vsub.f32 %v309, %v316
    %v319 = vmul.f32 %v317, 1.442695
    %v320 = vpow.pop %v319
    %v321 = vmul.f32 %v318, 1.442695
    %v322 = vpow.pop %v321
    %v323 = vsel %vm154, %v320, 0.0
    %324 = vadd.xlane.f32.xlu0 %v323
    %v325 = vpop.xlane.xlu0 %324
    %v326 = vsel %vm154, %v322, 0.0
    %327 = vadd.xlane.f32.xlu0 %v326
    %v328 = vpop.xlane.xlu0 %327
    %v329 = vrcp.pop %v325
    %v330 = vmul.f32 %v325, %v329
    %v331 = vsub.f32 1.0, %v330
    %v332 = vmul.f32 %v329, %v331
    %v333 = vadd.f32 %v329, %v332
    %vm334 = vweird.f32 %v325
    %vm335 = vweird.f32 %v329
    %vm336 = vmor %vm334, %vm335
    %v337 = vsel %vm336, %v329, %v333
    %v338 = vand.u32 2147483647, %v325
    %vm339 = vcmp.eq.f32.partialorder %v338, 8.507059e+37
    %v340 = vand.u32 %v325, 2147483648
    %v341 = vor.u32 1.1754944e-38, %v340
    %v342 = vsel %vm339, %v341, %v337
    %v343 = vmul.f32 %v320, %v342
    %v344 = vrcp.pop %v328
    %v345 = vmul.f32 %v328, %v344
    %v346 = vsub.f32 1.0, %v345
    %v347 = vmul.f32 %v344, %v346
    %v348 = vadd.f32 %v344, %v347
    %vm349 = vweird.f32 %v328
    %vm350 = vweird.f32 %v344
    %vm351 = vmor %vm349, %vm350
    %v352 = vsel %vm351, %v344, %v348
    %v353 = vand.u32 2147483647, %v328
    %vm354 = vcmp.eq.f32.partialorder %v353, 8.507059e+37
    %v355 = vand.u32 %v328, 2147483648
    %v356 = vor.u32 1.1754944e-38, %v355
    %v357 = vsel %vm354, %v356, %v352
    %v358 = vmul.f32 %v322, %v357
    %359 = vrot.lane.b32.xlu0 %v90, 48
    %v360 = vpop.permute.xlu0 %359
    %v363 = vsel %vm154, %v343, 0
    %365 = vmatpush.msra.mxu0 0.0
    %366 = vmatpush.msra.mxu0 0.0
    %367 = vmatpush.msra.mxu0 0.0
    %368 = vmatpush.msra.mxu0 0.0
    %369 = vmatpush.msra.mxu0 0.0
    %370 = vmatpush.msra.mxu0 0.0
    %371 = vmatpush.msra.mxu0 0.0
    %372 = vmatpush.msra.mxu0 0.0
    %373 = vmatpush.msra.mxu0 0.0
    %374 = vmatpush.msra.mxu0 0.0
    %375 = vmatpush.msra.mxu0 0.0
    %376 = vmatpush.msra.mxu0 0.0
    %377 = vmatpush.msra.mxu0 0.0
    %378 = vmatpush.msra.mxu0 0.0
    %379 = vmatpush.msra.mxu0 0.0
    %380 = vmatpush.msra.mxu0 %v360
    %381 = vmatmul.f32.gmra.mxu0 %v363
    %v382 = vpop.f32.mrf.mxu0
    %v383 = vadd.f32 0.0, %v382
    %384 = vdwg.mxu0
    %385 = vrot.lane.b32.xlu0 %v93, 48
    %v386 = vpop.permute.xlu0 %385
    %v389 = vsel %vm154, %v358, 0
    %391 = vmatpush.msra.mxu0 0.0
    %392 = vmatpush.msra.mxu0 0.0
    %393 = vmatpush.msra.mxu0 0.0
    %394 = vmatpush.msra.mxu0 0.0
    %395 = vmatpush.msra.mxu0 0.0
    %396 = vmatpush.msra.mxu0 0.0
    %397 = vmatpush.msra.mxu0 0.0
    %398 = vmatpush.msra.mxu0 0.0
    %399 = vmatpush.msra.mxu0 0.0
    %400 = vmatpush.msra.mxu0 0.0
    %401 = vmatpush.msra.mxu0 0.0
    %402 = vmatpush.msra.mxu0 0.0
    %403 = vmatpush.msra.mxu0 0.0
    %404 = vmatpush.msra.mxu0 0.0
    %405 = vmatpush.msra.mxu0 0.0
    %406 = vmatpush.msra.mxu0 %v386
    %407 = vmatmul.f32.gmra.mxu0 %v389
    %v408 = vpop.f32.mrf.mxu0
    %v409 = vadd.f32 0.0, %v408
    %410 = vdwg.mxu0
    %413 = vrot.lane.b32.xlu0 %v383, 16
    %v414 = vpop.permute.xlu0 %413
    %415 = vrot.lane.b32.xlu0 %v409, 16
    %v416 = vpop.permute.xlu0 %415
    %v419 = vsel %vm100, %v227, %v414
    %v420 = vsel %vm100, %v253, %v416
    %v421 = vperm.slane %v52, 0
    %426 = vrot.lane.b32.xlu0 %v48, 32
    %v427 = vpop.permute.xlu0 %426
    %428 = vrot.lane.b32.xlu0 %v49, 32
    %v429 = vpop.permute.xlu0 %428
    %430 = vrot.lane.b32.xlu0 %v50, 32
    %v431 = vpop.permute.xlu0 %430
    %432 = vrot.lane.b32.xlu0 %v51, 32
    %v433 = vpop.permute.xlu0 %432
    %439 = vrot.lane.b32.xlu0 %v421, 32
    %v440 = vpop.permute.xlu0 %439
    %v443 = vsel %vm53, %v419, 0
    %v446 = vsel %vm53, %v420, 0
    %448 = vmatpush.msra.mxu0 0.0
    %449 = vmatpush.msra.mxu0 0.0
    %450 = vmatpush.msra.mxu0 0.0
    %451 = vmatpush.msra.mxu0 0.0
    %452 = vmatpush.msra.mxu0 0.0
    %453 = vmatpush.msra.mxu0 0.0
    %454 = vmatpush.msra.mxu0 0.0
    %455 = vmatpush.msra.mxu0 0.0
    %456 = vmatpush.msra.mxu0 0.0
    %457 = vmatpush.msra.mxu0 0.0
    %458 = vmatpush.msra.mxu0 0.0
    %459 = vmatpush.msra.mxu0 0.0
    %460 = vmatpush.msra.mxu0 %v433
    %461 = vmatpush.msra.mxu0 %v431
    %462 = vmatpush.msra.mxu0 %v429
    %463 = vmatpush.msra.mxu0 %v427
    %464 = vmatmul.f32.gmra.mxu0 %v443
    %v465 = vpop.f32.mrf.mxu0
    %v466 = vadd.f32 %v440, %v465
    %467 = vmatmul.f32.gmra.mxu0 %v446
    %v468 = vpop.f32.mrf.mxu0
    %v469 = vadd.f32 %v440, %v468
    %470 = vdwg.mxu0
    %471 = vst.msk [vmem:[#allocation7] sm:$0xff] %vm53, %v466
    %472 = vst.msk [vmem:[#allocation7 + $0x8] sm:$0xff] %vm53, %v469
    // Predicated region
    $region18: #{tpu_custom_call.1} parent=1 // pred_check
      _
    $region19: #{tpu_custom_call.1} parent=1 // pred_check_branch
      %474 = sbr.rel (0) target = $region21
    $region20: #{tpu_custom_call.1} parent=1 // pred_region
      %476 = vsyncadd [#allocation4], 0
      %s477 = sshll.u32 [#allocation7], 4
      %s478 = int_to_ptr.vmem [resolvable:$true] %s477
      %s479 = sshll.u32 %s2, 4
      %s480 = int_to_ptr.hbm [resolvable:$true] %s479
      %485 = dma.vmem_to_hbm [thread:$0]  %s478, 256, %s480, [#allocation4], 128, 128, 8
    $region21: #{tpu_custom_call.1} parent=1 // pred_fallthru
      _
    // Predicated region
    $region22: #{tpu_custom_call.1} parent=1 // pred_check
      _
    $region23: #{tpu_custom_call.1} parent=1 // pred_check_branch
      %487 = sbr.rel (0) target = $region25
    $region24: #{tpu_custom_call.1} parent=1 // pred_region
      %489 = dma.done [#allocation4], 256
    $region25: #{tpu_custom_call.1} parent=1 // pred_fallthru
      _
    %490 = vsyncpa [#allocation3], 1
    %491 = vsyncpa [#allocation6], 1
    %492 = vsyncpa [#allocation4], 1

</llo_original>
